<compile_context>
chip_gen: v6e
topology: v6e:2x2x1
jax: 0.10.0
libtpu: 0.0.40
codegen_flags: <defaults>
</compile_context>

<pallas_src>
import functools

import jax
import jax.numpy as jnp
from jax.experimental import pallas as pl
from jax.experimental.pallas import tpu as pltpu

_LANE = 128
_SUBLANE = 8


# ----------------------------------------------------------------------------
# Fused kernel: out_tile = (x_tile @ W1 + b1) @ W2 + b2
# Grid iterates over row tiles of x; W1/b1/W2/b2 stay resident in VMEM.
# ----------------------------------------------------------------------------
def sgc_kernel(x_ref, w1_ref, b1_ref, w2_ref, b2_ref, o_ref):
    cdt = w1_ref.dtype                      # MXU operand dtype (f32 or bf16)
    x = x_ref[...].astype(cdt)
    # First Linear: (tile_m, F) @ (F, Hp) + (1, Hp); accumulate in f32.
    h = jnp.dot(x, w1_ref[...], preferred_element_type=jnp.float32)
    h = h + b1_ref[...]
    # F.dropout -> identity (eval / deterministic mode); see TODO at top.
    # Second Linear: (tile_m, Hp) @ (Hp, Cp) + (1, Cp); accumulate in f32.
    out = jnp.dot(h.astype(cdt), w2_ref[...], preferred_element_type=jnp.float32)
    o_ref[...] = (out + b2_ref[...]).astype(o_ref.dtype)


# ----------------------------------------------------------------------------
# One-time parameter preparation (call once, NOT per forward).
# ----------------------------------------------------------------------------
def prepare_sgc_params(w1, b1, w2, b2, *, compute_dtype=jnp.float32):
    """Zero-pad hidden/class dims to a 128-lane multiple (lane-aligned MXU
    operands, unmasked lane-dense output stores) and cast the weights to the
    MXU operand dtype. Biases stay f32 (added to the f32 accumulator)."""
    F, H = w1.shape
    C = w2.shape[1]
    Hp = pl.cdiv(H, _LANE) * _LANE
    Cp = pl.cdiv(C, _LANE) * _LANE
    w1_p = jnp.pad(w1, ((0, 0), (0, Hp - H))).astype(compute_dtype)
    b1_p = jnp.pad(b1.reshape(1, H), ((0, 0), (0, Hp - H))).astype(jnp.float32)
    w2_p = jnp.pad(w2, ((0, Hp - H), (0, Cp - C))).astype(compute_dtype)
    b2_p = jnp.pad(b2.reshape(1, C), ((0, 0), (0, Cp - C))).astype(jnp.float32)
    return w1_p, b1_p, w2_p, b2_p


def _pick_tile_m(M, max_tile=512):
    """Row-tile size: big tiles amortize the ~0.35us/step serial grid cost on
    single-TC v5e/v6e; for moderate M keep the grid length at 2 so the
    'parallel' row axis feeds both of v7x's TensorCores."""
    if M <= _SUBLANE:
        return _SUBLANE
    if M <= 2 * max_tile:
        half = -(-M // 2)                        # ceil(M / 2) -> grid of 2
        return -(-half // _SUBLANE) * _SUBLANE   # round up to sublane multiple
    return max_tile


# ----------------------------------------------------------------------------
# Forward
# ----------------------------------------------------------------------------
@functools.partial(jax.jit, static_argnames=("nclass", "tile_m"))
def sgc_forward(x, w1_p, b1_p, w2_p, b2_p, *, nclass, tile_m=None):
    """SGC forward. x:[M,F] f32, prepared (padded) params -> [M, nclass] f32."""
    M, F = x.shape
    Hp = w1_p.shape[1]
    Cp = w2_p.shape[1]
    if tile_m is None:
        tile_m = _pick_tile_m(M)
    grid_m = pl.cdiv(M, tile_m)   # ragged last tile handled by Pallas masking

    # VMEM footprint (conservatively count double buffers everywhere).
    w_bytes = w1_p.dtype.itemsize
    resident = (F * Hp + Hp * Cp) * w_bytes + (Hp + Cp) * 4
    footprint = (
        2 * tile_m * F * x.dtype.itemsize      # x tile (double-buffered)
        + 2 * tile_m * Cp * 4                  # out tile (double-buffered)
        + 2 * resident                         # weights + biases
        + tile_m * Hp * 4                      # hidden activation temp
    )
    # Residency guard: past ~40 MiB, tile W1 over a K (nfeat) grid axis
    # ("arbitrary") with an f32 accumulator instead of keeping it resident
    # (v7x only has 64 MiB of physical VMEM).
    assert footprint < 40 * 1024 * 1024, footprint
    vmem_limit = min(max(2 * footprint, 16 * 1024 * 1024), 64 * 1024 * 1024)

    cost = pl.CostEstimate(
        flops=2 * M * (F * Hp + Hp * Cp),
        transcendentals=0,
        bytes_accessed=(x.size * x.dtype.itemsize
                        + w1_p.size * w_bytes + w2_p.size * w_bytes
                        + (b1_p.size + b2_p.size) * 4
                        + M * Cp * 4),
    )

    out = pl.pallas_call(
        sgc_kernel,
        out_shape=jax.ShapeDtypeStruct((M, Cp), jnp.float32),
        grid_spec=pltpu.PrefetchScalarGridSpec(
            num_scalar_prefetch=0,
            grid=(grid_m,),
            in_specs=[
                pl.BlockSpec((tile_m, F), lambda i: (i, 0)),   # x row tile
                pl.BlockSpec((F, Hp), lambda i: (0, 0)),       # W1 (resident)
                pl.BlockSpec((1, Hp), lambda i: (0, 0)),       # b1
                pl.BlockSpec((Hp, Cp), lambda i: (0, 0)),      # W2 (resident)
                pl.BlockSpec((1, Cp), lambda i: (0, 0)),       # b2
            ],
            out_specs=pl.BlockSpec((tile_m, Cp), lambda i: (i, 0)),
        ),
        compiler_params=pltpu.CompilerParams(
            dimension_semantics=("parallel",),   # v7x: shard row tiles on 2 TCs
            vmem_limit_bytes=vmem_limit,
        ),
        cost_estimate=cost,
    )(x, w1_p, b1_p, w2_p, b2_p)

    # Only remaining wrapper copy: strip the lane-pad columns (Cp -> nclass).
    return out[:, :nclass]


# ----------------------------------------------------------------------------
# Reference (pure JAX) and deterministic parameter construction
# ----------------------------------------------------------------------------
def reference_forward(x, w1, b1, w2, b2):
    h = x @ w1 + b1            # self.W1(x)
    # dropout -> identity in eval / deterministic mode
    return h @ w2 + b2         # self.W(h)


def kaiming_uniform_linear(key, fan_in, fan_out):
    """nn.Linear default init (kaiming_uniform weights, uniform bias),
    stored pre-transposed as (in, out) so forward is x @ W + b."""
    kw, kb = jax.random.split(key)
    wlim = jnp.sqrt(3.0 / fan_in)
    blim = jnp.sqrt(1.0 / fan_in)
    w = jax.random.uniform(kw, (fan_in, fan_out), jnp.float32, -wlim, wlim)
    b = jax.random.uniform(kb, (1, fan_out), jnp.float32, -blim, blim)
    return w, b


if __name__ == "__main__":
    key = jax.random.PRNGKey(0)
    batch = 512      # number of (k-step pre-propagated) node feature rows
    nfeat = 256
    n_hid = 128
    nclass = 16
    # dropout = 0.5 -> identity in eval / deterministic mode (TODO at top)

    k_x, k_l1, k_l2 = jax.random.split(key, 3)
    x = jax.random.normal(k_x, (batch, nfeat), jnp.float32)
    w1, b1 = kaiming_uniform_linear(k_l1, nfeat, n_hid)
    w2, b2 = kaiming_uniform_linear(k_l2, n_hid, nclass)

    ref = reference_forward(x, w1, b1, w2, b2)

    # f32 MXU operands: matches the dense reference to 1e-4.
    params = prepare_sgc_params(w1, b1, w2, b2)              # one-time prep
    out = jax.block_until_ready(sgc_forward(x, *params, nclass=nclass))
    assert out.shape == (batch, nclass), out.shape
    assert jnp.allclose(out, ref, atol=1e-4, rtol=1e-4), float(
        jnp.max(jnp.abs(out - ref))
    )

    # Optional bf16 MXU operands (f32 accumulate): higher MXU rate at scale.
    params_bf16 = prepare_sgc_params(w1, b1, w2, b2, compute_dtype=jnp.bfloat16)
    out_bf16 = jax.block_until_ready(sgc_forward(x, *params_bf16, nclass=nclass))
    assert out_bf16.shape == (batch, nclass), out_bf16.shape
    assert jnp.allclose(out_bf16, ref, atol=5e-2, rtol=5e-2), float(
        jnp.max(jnp.abs(out_bf16 - ref))
    )

    print("KERNEL_OK")
</pallas_src>

<mosaic_0001>
module attributes {stable_mosaic.version = 11 : i64} {
  func.func @sgc_kernel(%arg0: i32, %arg1: memref<256x256xf32, #tpu.memory_space<vmem>>, %arg2: memref<256x128xf32, #tpu.memory_space<vmem>>, %arg3: memref<1x128xf32, #tpu.memory_space<vmem>>, %arg4: memref<128x128xf32, #tpu.memory_space<vmem>>, %arg5: memref<1x128xf32, #tpu.memory_space<vmem>>, %arg6: memref<256x128xf32, #tpu.memory_space<vmem>>) attributes {dimension_semantics = [#tpu.dimension_semantics<parallel>], iteration_bounds = array<i64: 2>, scalar_prefetch = 0 : i64, scratch_operands = 0 : i64, tpu.core_type = #tpu.core_type<tc>, window_params = [{transform_indices = @transform_0, window_bounds = array<i64: 256, 256>}, {pipeline_mode = #tpu.pipeline_mode<synchronous>, transform_indices = @transform_1, window_bounds = array<i64: 256, 128>}, {pipeline_mode = #tpu.pipeline_mode<synchronous>, transform_indices = @transform_2, window_bounds = array<i64: 1, 128>}, {pipeline_mode = #tpu.pipeline_mode<synchronous>, transform_indices = @transform_3, window_bounds = array<i64: 128, 128>}, {pipeline_mode = #tpu.pipeline_mode<synchronous>, transform_indices = @transform_4, window_bounds = array<i64: 1, 128>}, {transform_indices = @transform_5, window_bounds = array<i64: 256, 128>}]} {
    %c0 = arith.constant 0 : index
    %c0_0 = arith.constant 0 : index
    %0 = vector.load %arg1[%c0, %c0_0] : memref<256x256xf32, #tpu.memory_space<vmem>>, vector<256x256xf32>
    %c0_1 = arith.constant 0 : index
    %c0_2 = arith.constant 0 : index
    %1 = vector.load %arg2[%c0_1, %c0_2] : memref<256x128xf32, #tpu.memory_space<vmem>>, vector<256x128xf32>
    %cst = arith.constant dense<0.000000e+00> : vector<256x128xf32>
    %2 = tpu.matmul %0, %1, %cst {dimension_numbers = #tpu.dot_dimension_numbers<[1], [0], [0], [1], [0, 0, 1, 1], [], []>} : vector<256x256xf32>, vector<256x128xf32>, vector<256x128xf32> -> vector<256x128xf32>
    %c0_3 = arith.constant 0 : index
    %c0_4 = arith.constant 0 : index
    %3 = vector.load %arg3[%c0_3, %c0_4] : memref<1x128xf32, #tpu.memory_space<vmem>>, vector<1x128xf32>
    %4 = vector.broadcast %3 : vector<1x128xf32> to vector<256x128xf32>
    %5 = arith.addf %2, %4 : vector<256x128xf32>
    %c0_5 = arith.constant 0 : index
    %c0_6 = arith.constant 0 : index
    %6 = vector.load %arg4[%c0_5, %c0_6] : memref<128x128xf32, #tpu.memory_space<vmem>>, vector<128x128xf32>
    %cst_7 = arith.constant dense<0.000000e+00> : vector<256x128xf32>
    %7 = tpu.matmul %5, %6, %cst_7 {dimension_numbers = #tpu.dot_dimension_numbers<[1], [0], [0], [1], [0, 0, 1, 1], [], []>} : vector<256x128xf32>, vector<128x128xf32>, vector<256x128xf32> -> vector<256x128xf32>
    %c0_8 = arith.constant 0 : index
    %c0_9 = arith.constant 0 : index
    %8 = vector.load %arg5[%c0_8, %c0_9] : memref<1x128xf32, #tpu.memory_space<vmem>>, vector<1x128xf32>
    %9 = vector.broadcast %8 : vector<1x128xf32> to vector<256x128xf32>
    %10 = arith.addf %7, %9 : vector<256x128xf32>
    %c0_10 = arith.constant 0 : index
    %c0_11 = arith.constant 0 : index
    %11 = vector.load %arg6[%c0_10, %c0_11] : memref<256x128xf32, #tpu.memory_space<vmem>>, vector<256x128xf32>
    tpu.vector_store %arg6[%c0_10, %c0_11], %10 {strides = array<i32>} : memref<256x128xf32, #tpu.memory_space<vmem>>, vector<256x128xf32>,
    return
  }
  func.func @transform_0(%arg0: i32) -> (i32, i32) {
    %c0_i32 = arith.constant 0 : i32
    %c0_i32_0 = arith.constant 0 : i32
    return %arg0, %c0_i32 : i32, i32
  }
  func.func @transform_1(%arg0: i32) -> (i32, i32) {
    %c0_i32 = arith.constant 0 : i32
    %c0_i32_0 = arith.constant 0 : i32
    %c0_i32_1 = arith.constant 0 : i32
    return %c0_i32, %c0_i32_0 : i32, i32
  }
  func.func @transform_2(%arg0: i32) -> (i32, i32) {
    %c0_i32 = arith.constant 0 : i32
    %c0_i32_0 = arith.constant 0 : i32
    %c0_i32_1 = arith.constant 0 : i32
    return %c0_i32, %c0_i32_0 : i32, i32
  }
  func.func @transform_3(%arg0: i32) -> (i32, i32) {
    %c0_i32 = arith.constant 0 : i32
    %c0_i32_0 = arith.constant 0 : i32
    %c0_i32_1 = arith.constant 0 : i32
    return %c0_i32, %c0_i32_0 : i32, i32
  }
  func.func @transform_4(%arg0: i32) -> (i32, i32) {
    %c0_i32 = arith.constant 0 : i32
    %c0_i32_0 = arith.constant 0 : i32
    %c0_i32_1 = arith.constant 0 : i32
    return %c0_i32, %c0_i32_0 : i32, i32
  }
  func.func @transform_5(%arg0: i32) -> (i32, i32) {
    %c0_i32 = arith.constant 0 : i32
    %c0_i32_0 = arith.constant 0 : i32
    return %arg0, %c0_i32 : i32, i32
  }
}

</mosaic_0001>

<llo_original>
// kernel: sgc_forward.1
$region0: #{sgc_forward.1}
  #allocation0 [shape = 'u32[]', space=smem, size = 0x4, offset = 0x4, fixed_abs, tag = 'smem constant byte address 0x4 - core index']
  #allocation1 [shape = 'u32[144,128]{1,0:T(1,128)}', space=vmem, size = 0x12000, scoped, tag = 'internal scratch']
  %s0 = inlined_call_operand.hbm [shape: f32[512,256], index: 0, kind: input, shape index: {}]
  %s1 = inlined_call_operand.hbm [shape: f32[256,128], index: 1, kind: input, shape index: {}]
  %s2 = inlined_call_operand.vmem [shape: f32[1,128], index: 2, kind: input, shape index: {}]
  %s3 = inlined_call_operand.hbm [shape: f32[128,128], index: 3, kind: input, shape index: {}]
  %s4 = inlined_call_operand.vmem [shape: f32[1,128], index: 4, kind: input, shape index: {}]
  %s5 = inlined_call_operand.vmem [shape: f32[512,128], index: 5, kind: output, shape index: {}]
  %s6 = sld [smem:[#allocation0]]
  $region65: #{sgc_forward.1} parent=0
    _
  %s8 = ssub.s32 1, %s6
  %s9 = scalar_select 0, %s8, %s6
  $region1: #{sgc_forward.1} parent=0
    #allocation2 [shape = 'u8[524288]{0}', space=vmem, size = 0x80000, scoped, tag = 'input window, operand 0']
    #allocation3 [shape = 's32[2]{0}', space=sflag, size = 0x8, scoped, tag = 'scoped memory for sgc_forward.1']
    #allocation4 [shape = 'u8[131072]{0}', space=vmem, size = 0x20000, scoped, tag = 'input window, operand 1, single buffered']
    #allocation5 [shape = 's32[1]{0}', space=sflag, size = 0x4, scoped, tag = 'scoped memory for sgc_forward.1']
    #allocation6 [shape = 'u8[65536]{0}', space=vmem, size = 0x10000, scoped, tag = 'input window, operand 3, single buffered']
    %10 = vsyncpa [#allocation3], 0
    %s11 = scalar_lea.sflag [#allocation3], 1
    %12 = vsyncpa %s11, 0
    %13 = vsyncpa [#allocation5], 0
    loop: start=0, step=1, limit=4
    $region2: #{sgc_forward.1} parent=1 // loop_pre_header
      _
    $region3: #{sgc_forward.1} parent=1 // loop_header
      %s15 = sphi 0, %s19
      %p16 = scmp.ge.s32.totalorder %s15, 4
      %s25 = sphi 0, %s27
      %s28 = sphi 0, %s25
      %s29 = sphi 0, %s28
      %s45 = sphi 0, %s29
      %s49 = sphi 0, %s49
      %s51 = sphi 0, %s49
      %s52 = sphi 0, %s51
      %s66 = sphi 0, %s52
      %s70 = sphi 0, %s70
      %s72 = sphi 0, %s70
      %s73 = sphi 0, %s72
      %s87 = sphi 0, %s73
      %s91 = sphi 0, %s91
      %s93 = sphi 0, %s91
      %s94 = sphi 0, %s93
      %s108 = sphi 0, %s94
      %s112 = sphi 0, %s112
      %s114 = sphi 0, %s112
      %s115 = sphi 0, %s114
      %s129 = sphi 0, %s115
      %s135 = sphi 0, %s137
      %s138 = sphi 0, %s135
      %s139 = sphi 0, %s138
      %s155 = sphi 0, %s139
    $region4: #{sgc_forward.1} parent=1 // loop_header_branch
      %18 = sbr.rel (%p16) target = $region8
    $region5: #{sgc_forward.1} parent=1 // loop_body
      %s20 = ssub.s32 %s15, 1
      %s21 = ssub.s32 %s15, 2
      %s22 = sadd.s32 %s15, 1
      %s23 = ssub.s32 %s15, %s22
      %p24 = scmp.eq.s32.totalorder %s23, 0
      %s26 = sadd.s32 %s25, 1
      %s27 = scalar_select %p24, %s25, %s26
      %p30 = pneg %p24
      %p31 = scmp.eq.s32.totalorder %s15, 1
      %p32 = por %p30, %p31
      %p33 = scmp.ne.s32.totalorder %s25, %s28
      %p34 = scmp.eq.s32.totalorder %s15, 0
      %p35 = por %p33, %p34
      %p36 = scmp.ne.s32.totalorder %s25, %s28
      %p37 = scmp.eq.s32.totalorder %s20, 1
      %p38 = por %p36, %p37
      %p39 = scmp.ne.s32.totalorder %s28, %s29
      %p40 = scmp.eq.s32.totalorder %s20, 0
      %p41 = por %p39, %p40
      %p42 = scmp.ne.s32.totalorder %s28, %s29
      %p43 = scmp.eq.s32.totalorder %s21, 1
      %p44 = por %p42, %p43
      %p46 = scmp.ne.s32.totalorder %s29, %s45
      %p47 = scmp.eq.s32.totalorder %s21, 0
      %p48 = por %p46, %p47
      %s50 = sadd.s32 %s49, 1
      %p53 = scmp.eq.s32.totalorder %s15, 1
      %p54 = scmp.ne.s32.totalorder %s49, %s51
      %p55 = scmp.eq.s32.totalorder %s15, 0
      %p56 = por %p54, %p55
      %p57 = scmp.ne.s32.totalorder %s49, %s51
      %p58 = scmp.eq.s32.totalorder %s20, 1
      %p59 = por %p57, %p58
      %p60 = scmp.ne.s32.totalorder %s51, %s52
      %p61 = scmp.eq.s32.totalorder %s20, 0
      %p62 = por %p60, %p61
      %p63 = scmp.ne.s32.totalorder %s51, %s52
      %p64 = scmp.eq.s32.totalorder %s21, 1
      %p65 = por %p63, %p64
      %p67 = scmp.ne.s32.totalorder %s52, %s66
      %p68 = scmp.eq.s32.totalorder %s21, 0
      %p69 = por %p67, %p68
      %s71 = sadd.s32 %s70, 1
      %p74 = scmp.eq.s32.totalorder %s15, 1
      %p75 = scmp.ne.s32.totalorder %s70, %s72
      %p76 = scmp.eq.s32.totalorder %s15, 0
      %p77 = por %p75, %p76
      %p78 = scmp.ne.s32.totalorder %s70, %s72
      %p79 = scmp.eq.s32.totalorder %s20, 1
      %p80 = por %p78, %p79
      %p81 = scmp.ne.s32.totalorder %s72, %s73
      %p82 = scmp.eq.s32.totalorder %s20, 0
      %p83 = por %p81, %p82
      %p84 = scmp.ne.s32.totalorder %s72, %s73
      %p85 = scmp.eq.s32.totalorder %s21, 1
      %p86 = por %p84, %p85
      %p88 = scmp.ne.s32.totalorder %s73, %s87
      %p89 = scmp.eq.s32.totalorder %s21, 0
      %p90 = por %p88, %p89
      %s92 = sadd.s32 %s91, 1
      %p95 = scmp.eq.s32.totalorder %s15, 1
      %p96 = scmp.ne.s32.totalorder %s91, %s93
      %p97 = scmp.eq.s32.totalorder %s15, 0
      %p98 = por %p96, %p97
      %p99 = scmp.ne.s32.totalorder %s91, %s93
      %p100 = scmp.eq.s32.totalorder %s20, 1
      %p101 = por %p99, %p100
      %p102 = scmp.ne.s32.totalorder %s93, %s94
      %p103 = scmp.eq.s32.totalorder %s20, 0
      %p104 = por %p102, %p103
      %p105 = scmp.ne.s32.totalorder %s93, %s94
      %p106 = scmp.eq.s32.totalorder %s21, 1
      %p107 = por %p105, %p106
      %p109 = scmp.ne.s32.totalorder %s94, %s108
      %p110 = scmp.eq.s32.totalorder %s21, 0
      %p111 = por %p109, %p110
      %s113 = sadd.s32 %s112, 1
      %p116 = scmp.eq.s32.totalorder %s15, 1
      %p117 = scmp.ne.s32.totalorder %s112, %s114
      %p118 = scmp.eq.s32.totalorder %s15, 0
      %p119 = por %p117, %p118
      %p120 = scmp.ne.s32.totalorder %s112, %s114
      %p121 = scmp.eq.s32.totalorder %s20, 1
      %p122 = por %p120, %p121
      %p123 = scmp.ne.s32.totalorder %s114, %s115
      %p124 = scmp.eq.s32.totalorder %s20, 0
      %p125 = por %p123, %p124
      %p126 = scmp.ne.s32.totalorder %s114, %s115
      %p127 = scmp.eq.s32.totalorder %s21, 1
      %p128 = por %p126, %p127
      %p130 = scmp.ne.s32.totalorder %s115, %s129
      %p131 = scmp.eq.s32.totalorder %s21, 0
      %p132 = por %p130, %p131
      %s133 = ssub.s32 %s15, %s22
      %p134 = scmp.eq.s32.totalorder %s133, 0
      %s136 = sadd.s32 %s135, 1
      %s137 = scalar_select %p134, %s135, %s136
      %p140 = pneg %p134
      %p141 = scmp.eq.s32.totalorder %s15, 1
      %p142 = por %p140, %p141
      %p143 = scmp.ne.s32.totalorder %s135, %s138
      %p144 = scmp.eq.s32.totalorder %s15, 0
      %p145 = por %p143, %p144
      %p146 = scmp.ne.s32.totalorder %s135, %s138
      %p147 = scmp.eq.s32.totalorder %s20, 1
      %p148 = por %p146, %p147
      %p149 = scmp.ne.s32.totalorder %s138, %s139
      %p150 = scmp.eq.s32.totalorder %s20, 0
      %p151 = por %p149, %p150
      %p152 = scmp.ne.s32.totalorder %s138, %s139
      %p153 = scmp.eq.s32.totalorder %s21, 1
      %p154 = por %p152, %p153
      %p156 = scmp.ne.s32.totalorder %s139, %s155
      %p157 = scmp.eq.s32.totalorder %s21, 0
      %p158 = por %p156, %p157
      %p159 = scmp.le.s32.totalorder 1, %s15
      %p160 = scmp.lt.s32.totalorder %s15, 3
      %p161 = pnand %p159, %p160
      %p162 = pneg %p161
      // Predicated region
      $region9: #{sgc_forward.1} parent=5 // pred_check
        _
      $region10: #{sgc_forward.1} parent=5 // pred_check_branch
        %164 = sbr.rel (%p161) target = $region12
      $region11: #{sgc_forward.1} parent=5 // pred_region
        %s165 = ssub.s32 %s15, 1
        // Predicated region
        $region13: #{sgc_forward.1} parent=11 // pred_check
          %p166 = pneg %p62
        $region14: #{sgc_forward.1} parent=11 // pred_check_branch
          %168 = sbr.rel (%p166) target = $region16
        $region15: #{sgc_forward.1} parent=11 // pred_region
          %s170 = ssub.s32 4096, 4096
          %171 = vsyncadd [#allocation5], %s170
          %s172 = sshll.u32 [#allocation4], 4
          %s173 = int_to_ptr.vmem [resolvable:$true] %s172
          %178 = dma.hbm_to_vmem [thread:$0]  %s1, 4096, %s173, [#allocation5], 128, 128, 8
        $region16: #{sgc_forward.1} parent=11 // pred_fallthru
          _
        // Predicated region
        $region17: #{sgc_forward.1} parent=11 // pred_check
          %p179 = pneg %p83
        $region18: #{sgc_forward.1} parent=11 // pred_check_branch
          %181 = sbr.rel (%p179) target = $region20
        $region19: #{sgc_forward.1} parent=11 // pred_region
          _
        $region20: #{sgc_forward.1} parent=11 // pred_fallthru
          _
        // Predicated region
        $region21: #{sgc_forward.1} parent=11 // pred_check
          %p182 = pneg %p104
        $region22: #{sgc_forward.1} parent=11 // pred_check_branch
          %184 = sbr.rel (%p182) target = $region24
        $region23: #{sgc_forward.1} parent=11 // pred_region
          %s186 = ssub.s32 2048, 2048
          %187 = vsyncadd [#allocation5], %s186
          %s188 = sshll.u32 [#allocation6], 4
          %s189 = int_to_ptr.vmem [resolvable:$true] %s188
          %194 = dma.hbm_to_vmem [thread:$0]  %s3, 2048, %s189, [#allocation5], 128, 128, 8
        $region24: #{sgc_forward.1} parent=11 // pred_fallthru
          _
        // Predicated region
        $region25: #{sgc_forward.1} parent=11 // pred_check
          %p195 = pneg %p125
        $region26: #{sgc_forward.1} parent=11 // pred_check_branch
          %197 = sbr.rel (%p195) target = $region28
        $region27: #{sgc_forward.1} parent=11 // pred_region
          _
        $region28: #{sgc_forward.1} parent=11 // pred_fallthru
          _
      $region12: #{sgc_forward.1} parent=5 // pred_fallthru
        _
      %p198 = scmp.lt.s32.totalorder %s15, 2
      // Predicated region
      $region29: #{sgc_forward.1} parent=5 // pred_check
        %p199 = pneg %p198
      $region30: #{sgc_forward.1} parent=5 // pred_check_branch
        %201 = sbr.rel (%p199) target = $region32
      $region31: #{sgc_forward.1} parent=5 // pred_region
        // Predicated region
        $region33: #{sgc_forward.1} parent=31 // pred_check
          %p202 = pneg %p35
        $region34: #{sgc_forward.1} parent=31 // pred_check_branch
          %204 = sbr.rel (%p202) target = $region36
        $region35: #{sgc_forward.1} parent=31 // pred_region
          %s205 = sand.u32 %s25, 1
          %s206 = scalar_lea.sflag [#allocation3], %s205
          %s207 = sand.u32 %s25, 1
          %s208 = smul.addr %s207, 512
          %s209 = scalar_lea.vmem [#allocation2], %s208
          %s210 = smul.u32 32, %s15
          %s212 = ssub.s32 8192, 8192
          %213 = vsyncadd %s206, %s212
          %s214 = smul.addr %s210, 2
          %s215 = smul.addr %s214, 128
          %s216 = scalar_lea.hbm %s0, %s215
          %s217 = sshll.u32 %s209, 4
          %s218 = int_to_ptr.vmem [resolvable:$true] %s217
          %223 = dma.hbm_to_vmem [thread:$0]  %s216, 8192, %s218, %s206, 256, 256, 16
        $region36: #{sgc_forward.1} parent=31 // pred_fallthru
          _
      $region32: #{sgc_forward.1} parent=5 // pred_fallthru
        _
      %p224 = scmp.le.s32.totalorder 1, %s15
      %p225 = scmp.lt.s32.totalorder %s15, 3
      %p226 = pnand %p224, %p225
      %p227 = pneg %p226
      // Predicated region
      $region37: #{sgc_forward.1} parent=5 // pred_check
        _
      $region38: #{sgc_forward.1} parent=5 // pred_check_branch
        %229 = sbr.rel (%p226) target = $region40
      $region39: #{sgc_forward.1} parent=5 // pred_region
        %s230 = ssub.s32 %s15, 1
        %s231 = sand.u32 %s28, 1
        %s232 = scalar_lea.sflag [#allocation3], %s231
        %s233 = sand.u32 %s28, 1
        %s234 = smul.addr %s233, 512
        %s235 = scalar_lea.vmem [#allocation2], %s234
        // Predicated region
        $region41: #{sgc_forward.1} parent=39 // pred_check
          %p236 = pneg %p41
        $region42: #{sgc_forward.1} parent=39 // pred_check_branch
          %238 = sbr.rel (%p236) target = $region44
        $region43: #{sgc_forward.1} parent=39 // pred_region
          %239 = dma.done %s232, 8192
        $region44: #{sgc_forward.1} parent=39 // pred_fallthru
          _
        // Predicated region
        $region45: #{sgc_forward.1} parent=39 // pred_check
          %p240 = pneg %p62
        $region46: #{sgc_forward.1} parent=39 // pred_check_branch
          %242 = sbr.rel (%p240) target = $region48
        $region47: #{sgc_forward.1} parent=39 // pred_region
          %243 = dma.done [#allocation5], 4096
        $region48: #{sgc_forward.1} parent=39 // pred_fallthru
          _
        // Predicated region
        $region49: #{sgc_forward.1} parent=39 // pred_check
          %p244 = pneg %p104
        $region50: #{sgc_forward.1} parent=39 // pred_check_branch
          %246 = sbr.rel (%p244) target = $region52
        $region51: #{sgc_forward.1} parent=39 // pred_region
          %247 = dma.done [#allocation5], 2048
        $region52: #{sgc_forward.1} parent=39 // pred_fallthru
          _
        %s248 = sand.u32 %s28, 1
        %s249 = scalar_lea.sflag [#allocation3], %s248
        %s250 = sand.u32 %s28, 1
        %s251 = smul.addr %s250, 512
        %s252 = scalar_lea.vmem [#allocation2], %s251
        %p253 = pneg %p41
        %p254 = pneg %p38
        %p255 = pneg %p62
        %p256 = pneg %p59
        %p257 = pneg %p83
        %p258 = pneg %p80
        %p259 = pneg %p104
        %p260 = pneg %p101
        %p261 = pneg %p125
        %p262 = pneg %p122
        %p263 = pneg %p151
        %p264 = pneg %p148
        %s265 = smul.u32 32, %s20
        %p266 = scmp.lt.s32.totalorder %s265, 63
        %s267 = scalar_select %p266, %s265, 63
        %s268 = smul.addr %s267, 8
        %s269 = scalar_lea.vmem %s5, %s268
        %s270 = smul.u32 32, %s20
        %s271 = smul.u32 32, %s20
        %p272 = scmp.lt.s32.totalorder %s271, 63
        %s273 = scalar_select %p272, %s271, 63
        %s274 = smul.addr %s273, 8
        %s275 = scalar_lea.vmem %s5, %s274
        %s276 = smul.u32 32, %s20
        %v277 = vld [vmem:[%s235] sm:$0xff]
        %v278 = vld [vmem:[%s235 + $0x8] sm:$0xff]
        %v279 = vld [vmem:[%s235 + $0x10] sm:$0xff]
        %v280 = vld [vmem:[%s235 + $0x18] sm:$0xff]
        %v281 = vld [vmem:[%s235 + $0x20] sm:$0xff]
        %v282 = vld [vmem:[%s235 + $0x28] sm:$0xff]
        %v283 = vld [vmem:[%s235 + $0x30] sm:$0xff]
        %v284 = vld [vmem:[%s235 + $0x38] sm:$0xff]
        %v285 = vld [vmem:[%s235 + $0x40] sm:$0xff]
        %v286 = vld [vmem:[%s235 + $0x48] sm:$0xff]
        %v287 = vld [vmem:[%s235 + $0x50] sm:$0xff]
        %v288 = vld [vmem:[%s235 + $0x58] sm:$0xff]
        %v289 = vld [vmem:[%s235 + $0x60] sm:$0xff]
        %v290 = vld [vmem:[%s235 + $0x68] sm:$0xff]
        %v291 = vld [vmem:[%s235 + $0x70] sm:$0xff]
        %v292 = vld [vmem:[%s235 + $0x78] sm:$0xff]
        %v293 = vld [vmem:[%s235 + $0x80] sm:$0xff]
        %v294 = vld [vmem:[%s235 + $0x88] sm:$0xff]
        %v295 = vld [vmem:[%s235 + $0x90] sm:$0xff]
        %v296 = vld [vmem:[%s235 + $0x98] sm:$0xff]
        %v297 = vld [vmem:[%s235 + $0xa0] sm:$0xff]
        %v298 = vld [vmem:[%s235 + $0xa8] sm:$0xff]
        %v299 = vld [vmem:[%s235 + $0xb0] sm:$0xff]
        %v300 = vld [vmem:[%s235 + $0xb8] sm:$0xff]
        %v301 = vld [vmem:[%s235 + $0xc0] sm:$0xff]
        %v302 = vld [vmem:[%s235 + $0xc8] sm:$0xff]
        %v303 = vld [vmem:[%s235 + $0xd0] sm:$0xff]
        %v304 = vld [vmem:[%s235 + $0xd8] sm:$0xff]
        %v305 = vld [vmem:[%s235 + $0xe0] sm:$0xff]
        %v306 = vld [vmem:[%s235 + $0xe8] sm:$0xff]
        %v307 = vld [vmem:[%s235 + $0xf0] sm:$0xff]
        %v308 = vld [vmem:[%s235 + $0xf8] sm:$0xff]
        %v309 = vld [vmem:[%s235 + $0x100] sm:$0xff]
        %v310 = vld [vmem:[%s235 + $0x108] sm:$0xff]
        %v311 = vld [vmem:[%s235 + $0x110] sm:$0xff]
        %v312 = vld [vmem:[%s235 + $0x118] sm:$0xff]
        %v313 = vld [vmem:[%s235 + $0x120] sm:$0xff]
        %v314 = vld [vmem:[%s235 + $0x128] sm:$0xff]
        %v315 = vld [vmem:[%s235 + $0x130] sm:$0xff]
        %v316 = vld [vmem:[%s235 + $0x138] sm:$0xff]
        %v317 = vld [vmem:[%s235 + $0x140] sm:$0xff]
        %v318 = vld [vmem:[%s235 + $0x148] sm:$0xff]
        %v319 = vld [vmem:[%s235 + $0x150] sm:$0xff]
        %v320 = vld [vmem:[%s235 + $0x158] sm:$0xff]
        %v321 = vld [vmem:[%s235 + $0x160] sm:$0xff]
        %v322 = vld [vmem:[%s235 + $0x168] sm:$0xff]
        %v323 = vld [vmem:[%s235 + $0x170] sm:$0xff]
        %v324 = vld [vmem:[%s235 + $0x178] sm:$0xff]
        %v325 = vld [vmem:[%s235 + $0x180] sm:$0xff]
        %v326 = vld [vmem:[%s235 + $0x188] sm:$0xff]
        %v327 = vld [vmem:[%s235 + $0x190] sm:$0xff]
        %v328 = vld [vmem:[%s235 + $0x198] sm:$0xff]
        %v329 = vld [vmem:[%s235 + $0x1a0] sm:$0xff]
        %v330 = vld [vmem:[%s235 + $0x1a8] sm:$0xff]
        %v331 = vld [vmem:[%s235 + $0x1b0] sm:$0xff]
        %v332 = vld [vmem:[%s235 + $0x1b8] sm:$0xff]
        %v333 = vld [vmem:[%s235 + $0x1c0] sm:$0xff]
        %v334 = vld [vmem:[%s235 + $0x1c8] sm:$0xff]
        %v335 = vld [vmem:[%s235 + $0x1d0] sm:$0xff]
        %v336 = vld [vmem:[%s235 + $0x1d8] sm:$0xff]
        %v337 = vld [vmem:[%s235 + $0x1e0] sm:$0xff]
        %v338 = vld [vmem:[%s235 + $0x1e8] sm:$0xff]
        %v339 = vld [vmem:[%s235 + $0x1f0] sm:$0xff]
        %v340 = vld [vmem:[%s235 + $0x1f8] sm:$0xff]
        %v341 = vld [vmem:[#allocation4] sm:$0xff]
        %v342 = vld [vmem:[#allocation4 + $0x8] sm:$0xff]
        %v343 = vld [vmem:[#allocation4 + $0x10] sm:$0xff]
        %v344 = vld [vmem:[#allocation4 + $0x18] sm:$0xff]
        %v345 = vld [vmem:[#allocation4 + $0x20] sm:$0xff]
        %v346 = vld [vmem:[#allocation4 + $0x28] sm:$0xff]
        %v347 = vld [vmem:[#allocation4 + $0x30] sm:$0xff]
        %v348 = vld [vmem:[#allocation4 + $0x38] sm:$0xff]
        %v349 = vld [vmem:[#allocation4 + $0x40] sm:$0xff]
        %v350 = vld [vmem:[#allocation4 + $0x48] sm:$0xff]
        %v351 = vld [vmem:[#allocation4 + $0x50] sm:$0xff]
        %v352 = vld [vmem:[#allocation4 + $0x58] sm:$0xff]
        %v353 = vld [vmem:[#allocation4 + $0x60] sm:$0xff]
        %v354 = vld [vmem:[#allocation4 + $0x68] sm:$0xff]
        %v355 = vld [vmem:[#allocation4 + $0x70] sm:$0xff]
        %v356 = vld [vmem:[#allocation4 + $0x78] sm:$0xff]
        %v357 = vld [vmem:[#allocation4 + $0x80] sm:$0xff]
        %v358 = vld [vmem:[#allocation4 + $0x88] sm:$0xff]
        %v359 = vld [vmem:[#allocation4 + $0x90] sm:$0xff]
        %v360 = vld [vmem:[#allocation4 + $0x98] sm:$0xff]
        %v361 = vld [vmem:[#allocation4 + $0xa0] sm:$0xff]
        %v362 = vld [vmem:[#allocation4 + $0xa8] sm:$0xff]
        %v363 = vld [vmem:[#allocation4 + $0xb0] sm:$0xff]
        %v364 = vld [vmem:[#allocation4 + $0xb8] sm:$0xff]
        %v365 = vld [vmem:[#allocation4 + $0xc0] sm:$0xff]
        %v366 = vld [vmem:[#allocation4 + $0xc8] sm:$0xff]
        %v367 = vld [vmem:[#allocation4 + $0xd0] sm:$0xff]
        %v368 = vld [vmem:[#allocation4 + $0xd8] sm:$0xff]
        %v369 = vld [vmem:[#allocation4 + $0xe0] sm:$0xff]
        %v370 = vld [vmem:[#allocation4 + $0xe8] sm:$0xff]
        %v371 = vld [vmem:[#allocation4 + $0xf0] sm:$0xff]
        %v372 = vld [vmem:[#allocation4 + $0xf8] sm:$0xff]
        %v373 = vld [vmem:[%s2] sm:$0x1]
        %v375 = vlaneseq
        %v376 = vshrl.u32 %v375, 7
        %v377 = vsub.s32 0, %v376
        %v378 = vrot.slane %v373, %v377
        %380 = vmatprep.subr.mxu0 0.0
        %381 = vmatpush1.msra.mxu0 %v356
        %382 = vmatprep.subr.mxu0 0.0
        %383 = vmatpush1.msra.mxu0 %v355
        %384 = vmatprep.subr.mxu0 0.0
        %385 = vmatpush1.msra.mxu0 %v354
        %386 = vmatprep.subr.mxu0 0.0
        %387 = vmatpush1.msra.mxu0 %v353
        %388 = vmatprep.subr.mxu0 0.0
        %389 = vmatpush1.msra.mxu0 %v352
        %390 = vmatprep.subr.mxu0 0.0
        %391 = vmatpush1.msra.mxu0 %v351
        %392 = vmatprep.subr.mxu0 0.0
        %393 = vmatpush1.msra.mxu0 %v350
        %394 = vmatprep.subr.mxu0 0.0
        %395 = vmatpush1.msra.mxu0 %v349
        %396 = vmatprep.subr.mxu0 0.0
        %397 = vmatpush1.msra.mxu0 %v348
        %398 = vmatprep.subr.mxu0 0.0
        %399 = vmatpush1.msra.mxu0 %v347
        %400 = vmatprep.subr.mxu0 0.0
        %401 = vmatpush1.msra.mxu0 %v346
        %402 = vmatprep.subr.mxu0 0.0
        %403 = vmatpush1.msra.mxu0 %v345
        %404 = vmatprep.subr.mxu0 0.0
        %405 = vmatpush1.msra.mxu0 %v344
        %406 = vmatprep.subr.mxu0 0.0
        %407 = vmatpush1.msra.mxu0 %v343
        %408 = vmatprep.subr.mxu0 0.0
        %409 = vmatpush1.msra.mxu0 %v342
        %410 = vmatprep.subr.mxu0 0.0
        %411 = vmatpush1.msra.mxu0 %v341
        %412 = vmatprep.subr.mxu0 0.0
        %413 = vmatpush2.msra.mxu0 %v372
        %414 = vmatprep.subr.mxu0 0.0
        %415 = vmatpush2.msra.mxu0 %v371
        %416 = vmatprep.subr.mxu0 0.0
        %417 = vmatpush2.msra.mxu0 %v370
        %418 = vmatprep.subr.mxu0 0.0
        %419 = vmatpush2.msra.mxu0 %v369
        %420 = vmatprep.subr.mxu0 0.0
        %421 = vmatpush2.msra.mxu0 %v368
        %422 = vmatprep.subr.mxu0 0.0
        %423 = vmatpush2.msra.mxu0 %v367
        %424 = vmatprep.subr.mxu0 0.0
        %425 = vmatpush2.msra.mxu0 %v366
        %426 = vmatprep.subr.mxu0 0.0
        %427 = vmatpush2.msra.mxu0 %v365
        %428 = vmatprep.subr.mxu0 0.0
        %429 = vmatpush2.msra.mxu0 %v364
        %430 = vmatprep.subr.mxu0 0.0
        %431 = vmatpush2.msra.mxu0 %v363
        %432 = vmatprep.subr.mxu0 0.0
        %433 = vmatpush2.msra.mxu0 %v362
        %434 = vmatprep.subr.mxu0 0.0
        %435 = vmatpush2.msra.mxu0 %v361
        %436 = vmatprep.subr.mxu0 0.0
        %437 = vmatpush2.msra.mxu0 %v360
        %438 = vmatprep.subr.mxu0 0.0
        %439 = vmatpush2.msra.mxu0 %v359
        %440 = vmatprep.subr.mxu0 0.0
        %441 = vmatpush2.msra.mxu0 %v358
        %442 = vmatprep.subr.mxu0 0.0
        %443 = vmatpush2.msra.mxu0 %v357
        %444 = vmatprep.mubr.f32.mxu0 %v278
        %445 = vmatmul.mubr.f32.gmra.mxu0 %v277
        %v446 = vpop.f32.mrf.mxu0
        %v447 = vadd.f32 %v378, %v446
        %v448 = vpop.f32.mrf.mxu0
        %449 = vmatprep.mubr.f32.mxu0 %v280
        %450 = vmatmul.mubr.f32.gmra.mxu0 %v279
        %v451 = vpop.f32.mrf.mxu0
        %v452 = vadd.f32 %v378, %v451
        %v453 = vpop.f32.mrf.mxu0
        %454 = vmatprep.mubr.f32.mxu0 %v282
        %455 = vmatmul.mubr.f32.gmra.mxu0 %v281
        %v456 = vpop.f32.mrf.mxu0
        %v457 = vadd.f32 %v378, %v456
        %v458 = vpop.f32.mrf.mxu0
        %459 = vmatprep.mubr.f32.mxu0 %v284
        %460 = vmatmul.mubr.f32.gmra.mxu0 %v283
        %v461 = vpop.f32.mrf.mxu0
        %v462 = vadd.f32 %v378, %v461
        %v463 = vpop.f32.mrf.mxu0
        %464 = vmatprep.mubr.f32.mxu0 %v286
        %465 = vmatmul.mubr.f32.gmra.mxu0 %v285
        %v466 = vpop.f32.mrf.mxu0
        %v467 = vadd.f32 %v378, %v466
        %v468 = vpop.f32.mrf.mxu0
        %469 = vmatprep.mubr.f32.mxu0 %v288
        %470 = vmatmul.mubr.f32.gmra.mxu0 %v287
        %v471 = vpop.f32.mrf.mxu0
        %v472 = vadd.f32 %v378, %v471
        %v473 = vpop.f32.mrf.mxu0
        %474 = vmatprep.mubr.f32.mxu0 %v290
        %475 = vmatmul.mubr.f32.gmra.mxu0 %v289
        %v476 = vpop.f32.mrf.mxu0
        %v477 = vadd.f32 %v378, %v476
        %v478 = vpop.f32.mrf.mxu0
        %479 = vmatprep.mubr.f32.mxu0 %v292
        %480 = vmatmul.mubr.f32.gmra.mxu0 %v291
        %v481 = vpop.f32.mrf.mxu0
        %v482 = vadd.f32 %v378, %v481
        %v483 = vpop.f32.mrf.mxu0
        %484 = vmatprep.mubr.f32.mxu0 %v294
        %485 = vmatmul.mubr.f32.gmra.mxu0 %v293
        %v486 = vpop.f32.mrf.mxu0
        %v487 = vadd.f32 %v378, %v486
        %v488 = vpop.f32.mrf.mxu0
        %489 = vmatprep.mubr.f32.mxu0 %v296
        %490 = vmatmul.mubr.f32.gmra.mxu0 %v295
        %v491 = vpop.f32.mrf.mxu0
        %v492 = vadd.f32 %v378, %v491
        %v493 = vpop.f32.mrf.mxu0
        %494 = vmatprep.mubr.f32.mxu0 %v298
        %495 = vmatmul.mubr.f32.gmra.mxu0 %v297
        %v496 = vpop.f32.mrf.mxu0
        %v497 = vadd.f32 %v378, %v496
        %v498 = vpop.f32.mrf.mxu0
        %499 = vmatprep.mubr.f32.mxu0 %v300
        %500 = vmatmul.mubr.f32.gmra.mxu0 %v299
        %v501 = vpop.f32.mrf.mxu0
        %v502 = vadd.f32 %v378, %v501
        %v503 = vpop.f32.mrf.mxu0
        %504 = vmatprep.mubr.f32.mxu0 %v302
        %505 = vmatmul.mubr.f32.gmra.mxu0 %v301
        %v506 = vpop.f32.mrf.mxu0
        %v507 = vadd.f32 %v378, %v506
        %v508 = vpop.f32.mrf.mxu0
        %509 = vmatprep.mubr.f32.mxu0 %v304
        %510 = vmatmul.mubr.f32.gmra.mxu0 %v303
        %v511 = vpop.f32.mrf.mxu0
        %v512 = vadd.f32 %v378, %v511
        %v513 = vpop.f32.mrf.mxu0
        %514 = vmatprep.mubr.f32.mxu0 %v306
        %515 = vmatmul.mubr.f32.gmra.mxu0 %v305
        %v516 = vpop.f32.mrf.mxu0
        %v517 = vadd.f32 %v378, %v516
        %v518 = vpop.f32.mrf.mxu0
        %519 = vmatprep.mubr.f32.mxu0 %v308
        %520 = vmatmul.mubr.f32.gmra.mxu0 %v307
        %v521 = vpop.f32.mrf.mxu0
        %v522 = vadd.f32 %v378, %v521
        %v523 = vpop.f32.mrf.mxu0
        %524 = vmatprep.mubr.f32.mxu0 %v310
        %525 = vmatmul.mubr.f32.gmra.mxu0 %v309
        %v526 = vpop.f32.mrf.mxu0
        %v527 = vadd.f32 %v378, %v526
        %v528 = vpop.f32.mrf.mxu0
        %529 = vmatprep.mubr.f32.mxu0 %v312
        %530 = vmatmul.mubr.f32.gmra.mxu0 %v311
        %v531 = vpop.f32.mrf.mxu0
        %v532 = vadd.f32 %v378, %v531
        %v533 = vpop.f32.mrf.mxu0
        %534 = vmatprep.mubr.f32.mxu0 %v314
        %535 = vmatmul.mubr.f32.gmra.mxu0 %v313
        %v536 = vpop.f32.mrf.mxu0
        %v537 = vadd.f32 %v378, %v536
        %v538 = vpop.f32.mrf.mxu0
        %539 = vmatprep.mubr.f32.mxu0 %v316
        %540 = vmatmul.mubr.f32.gmra.mxu0 %v315
        %v541 = vpop.f32.mrf.mxu0
        %v542 = vadd.f32 %v378, %v541
        %v543 = vpop.f32.mrf.mxu0
        %544 = vmatprep.mubr.f32.mxu0 %v318
        %545 = vmatmul.mubr.f32.gmra.mxu0 %v317
        %v546 = vpop.f32.mrf.mxu0
        %v547 = vadd.f32 %v378, %v546
        %v548 = vpop.f32.mrf.mxu0
        %549 = vmatprep.mubr.f32.mxu0 %v320
        %550 = vmatmul.mubr.f32.gmra.mxu0 %v319
        %v551 = vpop.f32.mrf.mxu0
        %v552 = vadd.f32 %v378, %v551
        %v553 = vpop.f32.mrf.mxu0
        %554 = vmatprep.mubr.f32.mxu0 %v322
        %555 = vmatmul.mubr.f32.gmra.mxu0 %v321
        %v556 = vpop.f32.mrf.mxu0
        %v557 = vadd.f32 %v378, %v556
        %v558 = vpop.f32.mrf.mxu0
        %559 = vmatprep.mubr.f32.mxu0 %v324
        %560 = vmatmul.mubr.f32.gmra.mxu0 %v323
        %v561 = vpop.f32.mrf.mxu0
        %v562 = vadd.f32 %v378, %v561
        %v563 = vpop.f32.mrf.mxu0
        %564 = vmatprep.mubr.f32.mxu0 %v326
        %565 = vmatmul.mubr.f32.gmra.mxu0 %v325
        %v566 = vpop.f32.mrf.mxu0
        %v567 = vadd.f32 %v378, %v566
        %v568 = vpop.f32.mrf.mxu0
        %569 = vmatprep.mubr.f32.mxu0 %v328
        %570 = vmatmul.mubr.f32.gmra.mxu0 %v327
        %v571 = vpop.f32.mrf.mxu0
        %v572 = vadd.f32 %v378, %v571
        %v573 = vpop.f32.mrf.mxu0
        %574 = vmatprep.mubr.f32.mxu0 %v330
        %575 = vmatmul.mubr.f32.gmra.mxu0 %v329
        %v576 = vpop.f32.mrf.mxu0
        %v577 = vadd.f32 %v378, %v576
        %v578 = vpop.f32.mrf.mxu0
        %579 = vmatprep.mubr.f32.mxu0 %v332
        %580 = vmatmul.mubr.f32.gmra.mxu0 %v331
        %v581 = vpop.f32.mrf.mxu0
        %v582 = vadd.f32 %v378, %v581
        %v583 = vpop.f32.mrf.mxu0
        %584 = vmatprep.mubr.f32.mxu0 %v334
        %585 = vmatmul.mubr.f32.gmra.mxu0 %v333
        %v586 = vpop.f32.mrf.mxu0
        %v587 = vadd.f32 %v378, %v586
        %v588 = vpop.f32.mrf.mxu0
        %589 = vmatprep.mubr.f32.mxu0 %v336
        %590 = vmatmul.mubr.f32.gmra.mxu0 %v335
        %v591 = vpop.f32.mrf.mxu0
        %v592 = vadd.f32 %v378, %v591
        %v593 = vpop.f32.mrf.mxu0
        %594 = vmatprep.mubr.f32.mxu0 %v338
        %595 = vmatmul.mubr.f32.gmra.mxu0 %v337
        %v596 = vpop.f32.mrf.mxu0
        %v597 = vadd.f32 %v378, %v596
        %v598 = vpop.f32.mrf.mxu0
        %599 = vmatprep.mubr.f32.mxu0 %v340
        %600 = vmatmul.mubr.f32.gmra.mxu0 %v339
        %v601 = vpop.f32.mrf.mxu0
        %v602 = vadd.f32 %v378, %v601
        %v603 = vpop.f32.mrf.mxu0
        %604 = vdwg.mxu0
        %v605 = vld [vmem:[#allocation6] sm:$0xff]
        %v606 = vld [vmem:[#allocation6 + $0x8] sm:$0xff]
        %v607 = vld [vmem:[#allocation6 + $0x10] sm:$0xff]
        %v608 = vld [vmem:[#allocation6 + $0x18] sm:$0xff]
        %v609 = vld [vmem:[#allocation6 + $0x20] sm:$0xff]
        %v610 = vld [vmem:[#allocation6 + $0x28] sm:$0xff]
        %v611 = vld [vmem:[#allocation6 + $0x30] sm:$0xff]
        %v612 = vld [vmem:[#allocation6 + $0x38] sm:$0xff]
        %v613 = vld [vmem:[#allocation6 + $0x40] sm:$0xff]
        %v614 = vld [vmem:[#allocation6 + $0x48] sm:$0xff]
        %v615 = vld [vmem:[#allocation6 + $0x50] sm:$0xff]
        %v616 = vld [vmem:[#allocation6 + $0x58] sm:$0xff]
        %v617 = vld [vmem:[#allocation6 + $0x60] sm:$0xff]
        %v618 = vld [vmem:[#allocation6 + $0x68] sm:$0xff]
        %v619 = vld [vmem:[#allocation6 + $0x70] sm:$0xff]
        %v620 = vld [vmem:[#allocation6 + $0x78] sm:$0xff]
        %v621 = vld [vmem:[%s4] sm:$0x1]
        %v623 = vlaneseq
        %v624 = vshrl.u32 %v623, 7
        %v625 = vsub.s32 0, %v624
        %v626 = vrot.slane %v621, %v625
        %628 = vmatprep.subr.mxu0 0.0
        %629 = vmatpush1.msra.mxu0 %v620
        %630 = vmatprep.subr.mxu0 0.0
        %631 = vmatpush1.msra.mxu0 %v619
        %632 = vmatprep.subr.mxu0 0.0
        %633 = vmatpush1.msra.mxu0 %v618
        %634 = vmatprep.subr.mxu0 0.0
        %635 = vmatpush1.msra.mxu0 %v617
        %636 = vmatprep.subr.mxu0 0.0
        %637 = vmatpush1.msra.mxu0 %v616
        %638 = vmatprep.subr.mxu0 0.0
        %639 = vmatpush1.msra.mxu0 %v615
        %640 = vmatprep.subr.mxu0 0.0
        %641 = vmatpush1.msra.mxu0 %v614
        %642 = vmatprep.subr.mxu0 0.0
        %643 = vmatpush1.msra.mxu0 %v613
        %644 = vmatprep.subr.mxu0 0.0
        %645 = vmatpush1.msra.mxu0 %v612
        %646 = vmatprep.subr.mxu0 0.0
        %647 = vmatpush1.msra.mxu0 %v611
        %648 = vmatprep.subr.mxu0 0.0
        %649 = vmatpush1.msra.mxu0 %v610
        %650 = vmatprep.subr.mxu0 0.0
        %651 = vmatpush1.msra.mxu0 %v609
        %652 = vmatprep.subr.mxu0 0.0
        %653 = vmatpush1.msra.mxu0 %v608
        %654 = vmatprep.subr.mxu0 0.0
        %655 = vmatpush1.msra.mxu0 %v607
        %656 = vmatprep.subr.mxu0 0.0
        %657 = vmatpush1.msra.mxu0 %v606
        %658 = vmatprep.subr.mxu0 0.0
        %659 = vmatpush1.msra.mxu0 %v605
        %660 = vmatprep.subr.mxu0 0.0
        %661 = vmatpush2.msra.mxu0 0.0
        %662 = vmatprep.subr.mxu0 0.0
        %663 = vmatpush2.msra.mxu0 0.0
        %664 = vmatprep.subr.mxu0 0.0
        %665 = vmatpush2.msra.mxu0 0.0
        %666 = vmatprep.subr.mxu0 0.0
        %667 = vmatpush2.msra.mxu0 0.0
        %668 = vmatprep.subr.mxu0 0.0
        %669 = vmatpush2.msra.mxu0 0.0
        %670 = vmatprep.subr.mxu0 0.0
        %671 = vmatpush2.msra.mxu0 0.0
        %672 = vmatprep.subr.mxu0 0.0
        %673 = vmatpush2.msra.mxu0 0.0
        %674 = vmatprep.subr.mxu0 0.0
        %675 = vmatpush2.msra.mxu0 0.0
        %676 = vmatprep.subr.mxu0 0.0
        %677 = vmatpush2.msra.mxu0 0.0
        %678 = vmatprep.subr.mxu0 0.0
        %679 = vmatpush2.msra.mxu0 0.0
        %680 = vmatprep.subr.mxu0 0.0
        %681 = vmatpush2.msra.mxu0 0.0
        %682 = vmatprep.subr.mxu0 0.0
        %683 = vmatpush2.msra.mxu0 0.0
        %684 = vmatprep.subr.mxu0 0.0
        %685 = vmatpush2.msra.mxu0 0.0
        %686 = vmatprep.subr.mxu0 0.0
        %687 = vmatpush2.msra.mxu0 0.0
        %688 = vmatprep.subr.mxu0 0.0
        %689 = vmatpush2.msra.mxu0 0.0
        %690 = vmatprep.subr.mxu0 0.0
        %691 = vmatpush2.msra.mxu0 0.0
        %692 = vmatprep.mubr.f32.mxu0 0.0
        %693 = vmatmul.mubr.f32.gmra.mxu0 %v447
        %v694 = vpop.f32.mrf.mxu0
        %v695 = vadd.f32 %v626, %v694
        %v696 = vpop.f32.mrf.mxu0
        %697 = vmatprep.mubr.f32.mxu0 0.0
        %698 = vmatmul.mubr.f32.gmra.mxu0 %v452
        %v699 = vpop.f32.mrf.mxu0
        %v700 = vadd.f32 %v626, %v699
        %v701 = vpop.f32.mrf.mxu0
        %702 = vmatprep.mubr.f32.mxu0 0.0
        %703 = vmatmul.mubr.f32.gmra.mxu0 %v457
        %v704 = vpop.f32.mrf.mxu0
        %v705 = vadd.f32 %v626, %v704
        %v706 = vpop.f32.mrf.mxu0
        %707 = vmatprep.mubr.f32.mxu0 0.0
        %708 = vmatmul.mubr.f32.gmra.mxu0 %v462
        %v709 = vpop.f32.mrf.mxu0
        %v710 = vadd.f32 %v626, %v709
        %v711 = vpop.f32.mrf.mxu0
        %712 = vmatprep.mubr.f32.mxu0 0.0
        %713 = vmatmul.mubr.f32.gmra.mxu0 %v467
        %v714 = vpop.f32.mrf.mxu0
        %v715 = vadd.f32 %v626, %v714
        %v716 = vpop.f32.mrf.mxu0
        %717 = vmatprep.mubr.f32.mxu0 0.0
        %718 = vmatmul.mubr.f32.gmra.mxu0 %v472
        %v719 = vpop.f32.mrf.mxu0
        %v720 = vadd.f32 %v626, %v719
        %v721 = vpop.f32.mrf.mxu0
        %722 = vmatprep.mubr.f32.mxu0 0.0
        %723 = vmatmul.mubr.f32.gmra.mxu0 %v477
        %v724 = vpop.f32.mrf.mxu0
        %v725 = vadd.f32 %v626, %v724
        %v726 = vpop.f32.mrf.mxu0
        %727 = vmatprep.mubr.f32.mxu0 0.0
        %728 = vmatmul.mubr.f32.gmra.mxu0 %v482
        %v729 = vpop.f32.mrf.mxu0
        %v730 = vadd.f32 %v626, %v729
        %v731 = vpop.f32.mrf.mxu0
        %732 = vmatprep.mubr.f32.mxu0 0.0
        %733 = vmatmul.mubr.f32.gmra.mxu0 %v487
        %v734 = vpop.f32.mrf.mxu0
        %v735 = vadd.f32 %v626, %v734
        %v736 = vpop.f32.mrf.mxu0
        %737 = vmatprep.mubr.f32.mxu0 0.0
        %738 = vmatmul.mubr.f32.gmra.mxu0 %v492
        %v739 = vpop.f32.mrf.mxu0
        %v740 = vadd.f32 %v626, %v739
        %v741 = vpop.f32.mrf.mxu0
        %742 = vmatprep.mubr.f32.mxu0 0.0
        %743 = vmatmul.mubr.f32.gmra.mxu0 %v497
        %v744 = vpop.f32.mrf.mxu0
        %v745 = vadd.f32 %v626, %v744
        %v746 = vpop.f32.mrf.mxu0
        %747 = vmatprep.mubr.f32.mxu0 0.0
        %748 = vmatmul.mubr.f32.gmra.mxu0 %v502
        %v749 = vpop.f32.mrf.mxu0
        %v750 = vadd.f32 %v626, %v749
        %v751 = vpop.f32.mrf.mxu0
        %752 = vmatprep.mubr.f32.mxu0 0.0
        %753 = vmatmul.mubr.f32.gmra.mxu0 %v507
        %v754 = vpop.f32.mrf.mxu0
        %v755 = vadd.f32 %v626, %v754
        %v756 = vpop.f32.mrf.mxu0
        %757 = vmatprep.mubr.f32.mxu0 0.0
        %758 = vmatmul.mubr.f32.gmra.mxu0 %v512
        %v759 = vpop.f32.mrf.mxu0
        %v760 = vadd.f32 %v626, %v759
        %v761 = vpop.f32.mrf.mxu0
        %762 = vmatprep.mubr.f32.mxu0 0.0
        %763 = vmatmul.mubr.f32.gmra.mxu0 %v517
        %v764 = vpop.f32.mrf.mxu0
        %v765 = vadd.f32 %v626, %v764
        %v766 = vpop.f32.mrf.mxu0
        %767 = vmatprep.mubr.f32.mxu0 0.0
        %768 = vmatmul.mubr.f32.gmra.mxu0 %v522
        %v769 = vpop.f32.mrf.mxu0
        %v770 = vadd.f32 %v626, %v769
        %v771 = vpop.f32.mrf.mxu0
        %772 = vmatprep.mubr.f32.mxu0 0.0
        %773 = vmatmul.mubr.f32.gmra.mxu0 %v527
        %v774 = vpop.f32.mrf.mxu0
        %v775 = vadd.f32 %v626, %v774
        %v776 = vpop.f32.mrf.mxu0
        %777 = vmatprep.mubr.f32.mxu0 0.0
        %778 = vmatmul.mubr.f32.gmra.mxu0 %v532
        %v779 = vpop.f32.mrf.mxu0
        %v780 = vadd.f32 %v626, %v779
        %v781 = vpop.f32.mrf.mxu0
        %782 = vmatprep.mubr.f32.mxu0 0.0
        %783 = vmatmul.mubr.f32.gmra.mxu0 %v537
        %v784 = vpop.f32.mrf.mxu0
        %v785 = vadd.f32 %v626, %v784
        %v786 = vpop.f32.mrf.mxu0
        %787 = vmatprep.mubr.f32.mxu0 0.0
        %788 = vmatmul.mubr.f32.gmra.mxu0 %v542
        %v789 = vpop.f32.mrf.mxu0
        %v790 = vadd.f32 %v626, %v789
        %v791 = vpop.f32.mrf.mxu0
        %792 = vmatprep.mubr.f32.mxu0 0.0
        %793 = vmatmul.mubr.f32.gmra.mxu0 %v547
        %v794 = vpop.f32.mrf.mxu0
        %v795 = vadd.f32 %v626, %v794
        %v796 = vpop.f32.mrf.mxu0
        %797 = vmatprep.mubr.f32.mxu0 0.0
        %798 = vmatmul.mubr.f32.gmra.mxu0 %v552
        %v799 = vpop.f32.mrf.mxu0
        %v800 = vadd.f32 %v626, %v799
        %v801 = vpop.f32.mrf.mxu0
        %802 = vmatprep.mubr.f32.mxu0 0.0
        %803 = vmatmul.mubr.f32.gmra.mxu0 %v557
        %v804 = vpop.f32.mrf.mxu0
        %v805 = vadd.f32 %v626, %v804
        %v806 = vpop.f32.mrf.mxu0
        %807 = vmatprep.mubr.f32.mxu0 0.0
        %808 = vmatmul.mubr.f32.gmra.mxu0 %v562
        %v809 = vpop.f32.mrf.mxu0
        %v810 = vadd.f32 %v626, %v809
        %v811 = vpop.f32.mrf.mxu0
        %812 = vmatprep.mubr.f32.mxu0 0.0
        %813 = vmatmul.mubr.f32.gmra.mxu0 %v567
        %v814 = vpop.f32.mrf.mxu0
        %v815 = vadd.f32 %v626, %v814
        %v816 = vpop.f32.mrf.mxu0
        %817 = vmatprep.mubr.f32.mxu0 0.0
        %818 = vmatmul.mubr.f32.gmra.mxu0 %v572
        %v819 = vpop.f32.mrf.mxu0
        %v820 = vadd.f32 %v626, %v819
        %v821 = vpop.f32.mrf.mxu0
        %822 = vmatprep.mubr.f32.mxu0 0.0
        %823 = vmatmul.mubr.f32.gmra.mxu0 %v577
        %v824 = vpop.f32.mrf.mxu0
        %v825 = vadd.f32 %v626, %v824
        %v826 = vpop.f32.mrf.mxu0
        %827 = vmatprep.mubr.f32.mxu0 0.0
        %828 = vmatmul.mubr.f32.gmra.mxu0 %v582
        %v829 = vpop.f32.mrf.mxu0
        %v830 = vadd.f32 %v626, %v829
        %v831 = vpop.f32.mrf.mxu0
        %832 = vmatprep.mubr.f32.mxu0 0.0
        %833 = vmatmul.mubr.f32.gmra.mxu0 %v587
        %v834 = vpop.f32.mrf.mxu0
        %v835 = vadd.f32 %v626, %v834
        %v836 = vpop.f32.mrf.mxu0
        %837 = vmatprep.mubr.f32.mxu0 0.0
        %838 = vmatmul.mubr.f32.gmra.mxu0 %v592
        %v839 = vpop.f32.mrf.mxu0
        %v840 = vadd.f32 %v626, %v839
        %v841 = vpop.f32.mrf.mxu0
        %842 = vmatprep.mubr.f32.mxu0 0.0
        %843 = vmatmul.mubr.f32.gmra.mxu0 %v597
        %v844 = vpop.f32.mrf.mxu0
        %v845 = vadd.f32 %v626, %v844
        %v846 = vpop.f32.mrf.mxu0
        %847 = vmatprep.mubr.f32.mxu0 0.0
        %848 = vmatmul.mubr.f32.gmra.mxu0 %v602
        %v849 = vpop.f32.mrf.mxu0
        %v850 = vadd.f32 %v626, %v849
        %v851 = vpop.f32.mrf.mxu0
        %852 = vdwg.mxu0
        %853 = vst [vmem:[%s275] sm:$0xff] %v695
        %854 = vst [vmem:[%s275 + $0x8] sm:$0xff] %v700
        %855 = vst [vmem:[%s275 + $0x10] sm:$0xff] %v705
        %856 = vst [vmem:[%s275 + $0x18] sm:$0xff] %v710
        %857 = vst [vmem:[%s275 + $0x20] sm:$0xff] %v715
        %858 = vst [vmem:[%s275 + $0x28] sm:$0xff] %v720
        %859 = vst [vmem:[%s275 + $0x30] sm:$0xff] %v725
        %860 = vst [vmem:[%s275 + $0x38] sm:$0xff] %v730
        %861 = vst [vmem:[%s275 + $0x40] sm:$0xff] %v735
        %862 = vst [vmem:[%s275 + $0x48] sm:$0xff] %v740
        %863 = vst [vmem:[%s275 + $0x50] sm:$0xff] %v745
        %864 = vst [vmem:[%s275 + $0x58] sm:$0xff] %v750
        %865 = vst [vmem:[%s275 + $0x60] sm:$0xff] %v755
        %866 = vst [vmem:[%s275 + $0x68] sm:$0xff] %v760
        %867 = vst [vmem:[%s275 + $0x70] sm:$0xff] %v765
        %868 = vst [vmem:[%s275 + $0x78] sm:$0xff] %v770
        %869 = vst [vmem:[%s275 + $0x80] sm:$0xff] %v775
        %870 = vst [vmem:[%s275 + $0x88] sm:$0xff] %v780
        %871 = vst [vmem:[%s275 + $0x90] sm:$0xff] %v785
        %872 = vst [vmem:[%s275 + $0x98] sm:$0xff] %v790
        %873 = vst [vmem:[%s275 + $0xa0] sm:$0xff] %v795
        %874 = vst [vmem:[%s275 + $0xa8] sm:$0xff] %v800
        %875 = vst [vmem:[%s275 + $0xb0] sm:$0xff] %v805
        %876 = vst [vmem:[%s275 + $0xb8] sm:$0xff] %v810
        %877 = vst [vmem:[%s275 + $0xc0] sm:$0xff] %v815
        %878 = vst [vmem:[%s275 + $0xc8] sm:$0xff] %v820
        %879 = vst [vmem:[%s275 + $0xd0] sm:$0xff] %v825
        %880 = vst [vmem:[%s275 + $0xd8] sm:$0xff] %v830
        %881 = vst [vmem:[%s275 + $0xe0] sm:$0xff] %v835
        %882 = vst [vmem:[%s275 + $0xe8] sm:$0xff] %v840
        %883 = vst [vmem:[%s275 + $0xf0] sm:$0xff] %v845
        %884 = vst [vmem:[%s275 + $0xf8] sm:$0xff] %v850
        %s885 = smul.u32 32, %s20
        %p886 = scmp.lt.s32.totalorder %s885, 63
        %s887 = scalar_select %p886, %s885, 63
        %s888 = smul.addr %s887, 8
        %s889 = scalar_lea.vmem %s5, %s888
        // Predicated region
        $region53: #{sgc_forward.1} parent=39 // pred_check
          %p890 = pneg %p148
        $region54: #{sgc_forward.1} parent=39 // pred_check_branch
          %892 = sbr.rel (%p890) target = $region56
        $region55: #{sgc_forward.1} parent=39 // pred_region
          %s893 = smul.u32 32, %s20
        $region56: #{sgc_forward.1} parent=39 // pred_fallthru
          _
      $region40: #{sgc_forward.1} parent=5 // pred_fallthru
        _
      %p894 = scmp.le.s32.totalorder 2, %s15
      // Predicated region
      $region57: #{sgc_forward.1} parent=5 // pred_check
        %p895 = pneg %p894
      $region58: #{sgc_forward.1} parent=5 // pred_check_branch
        %897 = sbr.rel (%p895) target = $region60
      $region59: #{sgc_forward.1} parent=5 // pred_region
        %s898 = ssub.s32 %s15, 2
        // Predicated region
        $region61: #{sgc_forward.1} parent=59 // pred_check
          %p899 = pneg %p154
        $region62: #{sgc_forward.1} parent=59 // pred_check_branch
          %901 = sbr.rel (%p899) target = $region64
        $region63: #{sgc_forward.1} parent=59 // pred_region
          %s902 = smul.u32 32, %s21
          %p903 = scmp.lt.s32.totalorder %s902, 63
          %s904 = scalar_select %p903, %s902, 63
          %s905 = smul.addr %s904, 8
          %s906 = scalar_lea.vmem %s5, %s905
        $region64: #{sgc_forward.1} parent=59 // pred_fallthru
          _
      $region60: #{sgc_forward.1} parent=5 // pred_fallthru
        _
    $region6: #{sgc_forward.1} parent=1 // loop_footer
      %s19 = sadd.s32 1, %s15
    $region7: #{sgc_forward.1} parent=1 // loop_footer_branch
      %14 = sbr.rel target = $region3
    $region8: #{sgc_forward.1} parent=1 // loop_exit
      _
    %907 = vsyncpa [#allocation3], 1
    %s908 = scalar_lea.sflag [#allocation3], 1
    %909 = vsyncpa %s908, 1
    %910 = vsyncpa [#allocation5], 1

</llo_original>
